<compile_context>
chip_gen: v7x
topology: tpu7x:2x2x1
jax: 0.10.0
libtpu: 0.0.40
codegen_flags: <defaults>
</compile_context>

<pallas_src>
import numpy as np
import jax
import jax.numpy as jnp
from jax.experimental import pallas as pl
from jax.experimental.pallas import tpu as pltpu

TWO_PI = 2.0 * np.pi


def _mish(h):
    # mish(x) = x * tanh(softplus(x)); overflow-safe softplus (exp/log/tanh on EUP).
    sp = jnp.maximum(h, 0.0) + jnp.log(1.0 + jnp.exp(-jnp.abs(h)))
    return h * jnp.tanh(sp)


def _make_kernel(num_linear):
    """num_linear = total number of Linear layers (num_hidden_layers + 1)."""

    def kernel(*refs):
        out_ref = refs[-1]
        sig = refs[0][...]                     # (TB, 1)      time steps (sigma)
        x = refs[1][...]                       # (TB, x_dim)
        cond = refs[2][...]                    # (TB, cond_dim)
        wf = refs[3][...]                      # (1, H)       fixed Fourier weights
        w0x, w0c, w0s, w0cc, b0 = (refs[k][...] for k in range(4, 9))

        # Gaussian Fourier projection, fused into the first matmul's prologue.
        # Reassociate so the 2*pi multiply runs over the (1, H) row only.
        proj = sig * (wf * TWO_PI)             # (TB, H) broadcast on the VPU
        sin_p = jnp.sin(proj)
        cos_p = jnp.cos(proj)

        # First Linear over the *virtual* concat [x, cond, sin, cos].
        h = (jnp.dot(x, w0x, preferred_element_type=jnp.float32)
             + jnp.dot(cond, w0c, preferred_element_type=jnp.float32)
             + jnp.dot(sin_p, w0s, preferred_element_type=jnp.float32)
             + jnp.dot(cos_p, w0cc, preferred_element_type=jnp.float32)
             + b0)
        h = _mish(h)

        k = 9
        for li in range(1, num_linear):
            w = refs[k][...]
            b = refs[k + 1][...]
            k += 2
            h = jnp.dot(h, w, preferred_element_type=jnp.float32) + b
            if li < num_linear - 1:            # no activation after the last layer
                h = _mish(h)

        out_ref[...] = h.astype(out_ref.dtype)  # one lane-dense full-block store
    return kernel


def _pick_tb(B, tb_max=1024):
    """Batch tile: whole batch if small, else largest dividing multiple of 8."""
    if B <= tb_max:
        return B
    for tb in (tb_max, 512, 256, 128, 64, 32, 16, 8):
        if B % tb == 0:
            return tb
    return B


def consistency_score_forward(x, cond, sigma, params, *, tb_max=1024):
    """Fused forward: GFP(sigma) + concat([x, cond, embed]) + Mish MLP."""
    B, x_dim = x.shape
    cond_dim = cond.shape[1]
    wf = params["W_fourier"]
    H = wf.shape[0]
    w0x, w0c, w0s, w0cc = params["w0x"], params["w0c"], params["w0s"], params["w0cc"]
    b0 = params["b0"]
    hidden_ws, hidden_bs = params["ws"], params["bs"]
    num_linear = 1 + len(hidden_ws)
    out_dim = hidden_bs[-1].shape[-1] if hidden_ws else b0.shape[-1]
    hid0 = b0.shape[-1]

    tb = _pick_tb(B, tb_max)
    grid = (B // tb,)

    sig2 = sigma.reshape(B, 1).astype(jnp.float32)
    wf2 = wf.reshape(1, H).astype(jnp.float32)

    batch_spec = lambda d: pl.BlockSpec((tb, d), lambda i: (i, 0))
    full_spec = lambda a: pl.BlockSpec(a.shape, lambda i: (0, 0))

    in_specs = [batch_spec(1), batch_spec(x_dim), batch_spec(cond_dim),
                full_spec(wf2), full_spec(w0x), full_spec(w0c),
                full_spec(w0s), full_spec(w0cc), full_spec(b0)]
    args = [sig2, x.astype(jnp.float32), cond.astype(jnp.float32),
            wf2, w0x, w0c, w0s, w0cc, b0]
    for w, b in zip(hidden_ws, hidden_bs):
        in_specs += [full_spec(w), full_spec(b)]
        args += [w, b]

    # Advisory cost estimate so XLA schedules the custom call sensibly.
    flops = 2 * B * ((x_dim + cond_dim + 2 * H) * hid0
                     + sum(int(w.shape[0]) * int(w.shape[1]) for w in hidden_ws))
    transc = B * (2 * H + 3 * hid0 * max(num_linear - 1, 0))
    bytes_acc = 4 * (B * (1 + x_dim + cond_dim + out_dim) + H
                     + int(w0x.size) + int(w0c.size) + int(w0s.size)
                     + int(w0cc.size) + int(b0.size)
                     + sum(int(w.size) for w in hidden_ws)
                     + sum(int(b.size) for b in hidden_bs))

    return pl.pallas_call(
        _make_kernel(num_linear),
        out_shape=jax.ShapeDtypeStruct((B, out_dim), jnp.float32),
        grid=grid,
        in_specs=in_specs,
        out_specs=pl.BlockSpec((tb, out_dim), lambda i: (i, 0)),
        compiler_params=pltpu.CompilerParams(
            dimension_semantics=("parallel",)),
        cost_estimate=pl.CostEstimate(flops=flops, transcendentals=transc,
                                      bytes_accessed=bytes_acc),
    )(*args)


def init_params(key, x_dim, cond_dim, time_embed_dim, hidden_dim,
                num_hidden_layers, output_dim, scale=30.0):
    H = time_embed_dim // 2
    in_dim = x_dim + cond_dim + time_embed_dim
    dims = [in_dim] + [hidden_dim] * num_hidden_layers + [output_dim]
    n_linear = len(dims) - 1
    keys = jax.random.split(key, 1 + 2 * n_linear)

    # GaussianFourierProjection fixed weights; scale folded in at init
    # (matches torch.randn(embed_dim // 2) * scale, requires_grad=False).
    W_fourier = jax.random.normal(keys[0], (H,), dtype=jnp.float32) * scale

    ws, bs = [], []
    for li in range(n_linear):
        bound = 1.0 / np.sqrt(dims[li])
        w = jax.random.uniform(keys[1 + 2 * li], (dims[li], dims[li + 1]),
                               jnp.float32, -bound, bound)   # (in, out) layout
        b = jax.random.uniform(keys[2 + 2 * li], (1, dims[li + 1]),
                               jnp.float32, -bound, bound)
        ws.append(w)
        bs.append(b)

    w0 = ws[0]
    return dict(
        W_fourier=W_fourier,
        w0x=w0[:x_dim],
        w0c=w0[x_dim:x_dim + cond_dim],
        w0s=w0[x_dim + cond_dim:x_dim + cond_dim + H],
        w0cc=w0[x_dim + cond_dim + H:],
        b0=bs[0],
        ws=ws[1:],
        bs=bs[1:],
    )


def _mish_np(h):
    sp = np.maximum(h, 0.0) + np.log(1.0 + np.exp(-np.abs(h)))
    return h * np.tanh(sp)


def ref_forward_np(x, cond, sigma, params):
    """Pure-numpy (float64) reference of the PyTorch forward (eval path)."""
    x = np.asarray(x, np.float64)
    cond = np.asarray(cond, np.float64)
    sigma = np.asarray(sigma, np.float64)
    Wf = np.asarray(params["W_fourier"], np.float64)
    proj = sigma[:, None] * Wf[None, :] * 2.0 * np.pi
    embed = np.concatenate([np.sin(proj), np.cos(proj)], axis=-1)
    W0 = np.concatenate([np.asarray(params[k], np.float64)
                         for k in ("w0x", "w0c", "w0s", "w0cc")], axis=0)
    h = np.concatenate([x, cond, embed], axis=-1) @ W0 \
        + np.asarray(params["b0"], np.float64)
    h = _mish_np(h)
    ws = [np.asarray(w, np.float64) for w in params["ws"]]
    bs = [np.asarray(b, np.float64) for b in params["bs"]]
    for li, (w, b) in enumerate(zip(ws, bs)):
        h = h @ w + b
        if li < len(ws) - 1:
            h = _mish_np(h)
    return h


if __name__ == "__main__":
    key = jax.random.PRNGKey(0)
    x_dim, cond_dim, time_embed_dim = 16, 8, 32
    hidden_dim, num_hidden_layers, output_dim = 64, 2, 16
    batch = 8

    k_p, k_x, k_c, k_s = jax.random.split(key, 4)
    params = init_params(k_p, x_dim, cond_dim, time_embed_dim,
                         hidden_dim, num_hidden_layers, output_dim)

    x = jax.random.normal(k_x, (batch, x_dim), dtype=jnp.float32)
    cond = jax.random.normal(k_c, (batch, cond_dim), dtype=jnp.float32)
    sigma = jax.random.uniform(k_s, (batch,), dtype=jnp.float32)

    out = consistency_score_forward(x, cond, sigma, params)
    out = jax.block_until_ready(out)
    assert out.shape == (batch, output_dim) and out.dtype == jnp.float32

    # Tolerance accounts for the MXU's multi-pass f32 matmul precision vs the
    # float64 host reference (3 small layers; values O(1)).
    ref = ref_forward_np(x, cond, sigma, params)
    np.testing.assert_allclose(np.asarray(out), ref.astype(np.float32),
                               rtol=2e-2, atol=2e-2)
    print("KERNEL_OK")
</pallas_src>

<mosaic_0001>
module attributes {stable_mosaic.version = 11 : i64} {
  func.func @kernel(%arg0: i32, %arg1: memref<8x1xf32, #tpu.memory_space<vmem>>, %arg2: memref<8x16xf32, #tpu.memory_space<vmem>>, %arg3: memref<8x8xf32, #tpu.memory_space<vmem>>, %arg4: memref<1x16xf32, #tpu.memory_space<vmem>>, %arg5: memref<16x64xf32, #tpu.memory_space<vmem>>, %arg6: memref<8x64xf32, #tpu.memory_space<vmem>>, %arg7: memref<16x64xf32, #tpu.memory_space<vmem>>, %arg8: memref<16x64xf32, #tpu.memory_space<vmem>>, %arg9: memref<1x64xf32, #tpu.memory_space<vmem>>, %arg10: memref<64x64xf32, #tpu.memory_space<vmem>>, %arg11: memref<1x64xf32, #tpu.memory_space<vmem>>, %arg12: memref<64x16xf32, #tpu.memory_space<vmem>>, %arg13: memref<1x16xf32, #tpu.memory_space<vmem>>, %arg14: memref<8x16xf32, #tpu.memory_space<vmem>>) attributes {dimension_semantics = [#tpu.dimension_semantics<parallel>], iteration_bounds = array<i64: 1>, scalar_prefetch = 0 : i64, scratch_operands = 0 : i64, tpu.core_type = #tpu.core_type<tc>, window_params = [{transform_indices = @transform_0, window_bounds = array<i64: 8, 1>}, {transform_indices = @transform_1, window_bounds = array<i64: 8, 16>}, {transform_indices = @transform_2, window_bounds = array<i64: 8, 8>}, {pipeline_mode = #tpu.pipeline_mode<synchronous>, transform_indices = @transform_3, window_bounds = array<i64: 1, 16>}, {pipeline_mode = #tpu.pipeline_mode<synchronous>, transform_indices = @transform_4, window_bounds = array<i64: 16, 64>}, {pipeline_mode = #tpu.pipeline_mode<synchronous>, transform_indices = @transform_5, window_bounds = array<i64: 8, 64>}, {pipeline_mode = #tpu.pipeline_mode<synchronous>, transform_indices = @transform_6, window_bounds = array<i64: 16, 64>}, {pipeline_mode = #tpu.pipeline_mode<synchronous>, transform_indices = @transform_7, window_bounds = array<i64: 16, 64>}, {pipeline_mode = #tpu.pipeline_mode<synchronous>, transform_indices = @transform_8, window_bounds = array<i64: 1, 64>}, {pipeline_mode = #tpu.pipeline_mode<synchronous>, transform_indices = @transform_9, window_bounds = array<i64: 64, 64>}, {pipeline_mode = #tpu.pipeline_mode<synchronous>, transform_indices = @transform_10, window_bounds = array<i64: 1, 64>}, {pipeline_mode = #tpu.pipeline_mode<synchronous>, transform_indices = @transform_11, window_bounds = array<i64: 64, 16>}, {pipeline_mode = #tpu.pipeline_mode<synchronous>, transform_indices = @transform_12, window_bounds = array<i64: 1, 16>}, {transform_indices = @transform_13, window_bounds = array<i64: 8, 16>}]} {
    %c0 = arith.constant 0 : index
    %c0_0 = arith.constant 0 : index
    %0 = vector.load %arg1[%c0, %c0_0] : memref<8x1xf32, #tpu.memory_space<vmem>>, vector<8x1xf32>
    %c0_1 = arith.constant 0 : index
    %c0_2 = arith.constant 0 : index
    %1 = vector.load %arg2[%c0_1, %c0_2] : memref<8x16xf32, #tpu.memory_space<vmem>>, vector<8x16xf32>
    %c0_3 = arith.constant 0 : index
    %c0_4 = arith.constant 0 : index
    %2 = vector.load %arg3[%c0_3, %c0_4] : memref<8x8xf32, #tpu.memory_space<vmem>>, vector<8x8xf32>
    %c0_5 = arith.constant 0 : index
    %c0_6 = arith.constant 0 : index
    %3 = vector.load %arg4[%c0_5, %c0_6] : memref<1x16xf32, #tpu.memory_space<vmem>>, vector<1x16xf32>
    %c0_7 = arith.constant 0 : index
    %c0_8 = arith.constant 0 : index
    %4 = vector.load %arg5[%c0_7, %c0_8] : memref<16x64xf32, #tpu.memory_space<vmem>>, vector<16x64xf32>
    %c0_9 = arith.constant 0 : index
    %c0_10 = arith.constant 0 : index
    %5 = vector.load %arg6[%c0_9, %c0_10] : memref<8x64xf32, #tpu.memory_space<vmem>>, vector<8x64xf32>
    %c0_11 = arith.constant 0 : index
    %c0_12 = arith.constant 0 : index
    %6 = vector.load %arg7[%c0_11, %c0_12] : memref<16x64xf32, #tpu.memory_space<vmem>>, vector<16x64xf32>
    %c0_13 = arith.constant 0 : index
    %c0_14 = arith.constant 0 : index
    %7 = vector.load %arg8[%c0_13, %c0_14] : memref<16x64xf32, #tpu.memory_space<vmem>>, vector<16x64xf32>
    %c0_15 = arith.constant 0 : index
    %c0_16 = arith.constant 0 : index
    %8 = vector.load %arg9[%c0_15, %c0_16] : memref<1x64xf32, #tpu.memory_space<vmem>>, vector<1x64xf32>
    %cst = arith.constant 6.28318548 : f32
    %9 = vector.broadcast %cst : f32 to vector<1x16xf32>
    %10 = arith.mulf %3, %9 : vector<1x16xf32>
    %11 = vector.broadcast %0 : vector<8x1xf32> to vector<8x16xf32>
    %12 = vector.broadcast %10 : vector<1x16xf32> to vector<8x16xf32>
    %13 = arith.mulf %11, %12 : vector<8x16xf32>
    %14 = math.sin %13 : vector<8x16xf32>
    %15 = math.cos %13 : vector<8x16xf32>
    %cst_17 = arith.constant dense<0.000000e+00> : vector<8x64xf32>
    %16 = tpu.matmul %1, %4, %cst_17 {dimension_numbers = #tpu.dot_dimension_numbers<[1], [0], [0], [1], [0, 0, 1, 1], [], []>} : vector<8x16xf32>, vector<16x64xf32>, vector<8x64xf32> -> vector<8x64xf32>
    %cst_18 = arith.constant dense<0.000000e+00> : vector<8x64xf32>
    %17 = tpu.matmul %2, %5, %cst_18 {dimension_numbers = #tpu.dot_dimension_numbers<[1], [0], [0], [1], [0, 0, 1, 1], [], []>} : vector<8x8xf32>, vector<8x64xf32>, vector<8x64xf32> -> vector<8x64xf32>
    %18 = arith.addf %16, %17 : vector<8x64xf32>
    %cst_19 = arith.constant dense<0.000000e+00> : vector<8x64xf32>
    %19 = tpu.matmul %14, %6, %cst_19 {dimension_numbers = #tpu.dot_dimension_numbers<[1], [0], [0], [1], [0, 0, 1, 1], [], []>} : vector<8x16xf32>, vector<16x64xf32>, vector<8x64xf32> -> vector<8x64xf32>
    %20 = arith.addf %18, %19 : vector<8x64xf32>
    %cst_20 = arith.constant dense<0.000000e+00> : vector<8x64xf32>
    %21 = tpu.matmul %15, %7, %cst_20 {dimension_numbers = #tpu.dot_dimension_numbers<[1], [0], [0], [1], [0, 0, 1, 1], [], []>} : vector<8x16xf32>, vector<16x64xf32>, vector<8x64xf32> -> vector<8x64xf32>
    %22 = arith.addf %20, %21 : vector<8x64xf32>
    %23 = vector.broadcast %8 : vector<1x64xf32> to vector<8x64xf32>
    %24 = arith.addf %22, %23 : vector<8x64xf32>
    %cst_21 = arith.constant 0.000000e+00 : f32
    %25 = vector.broadcast %cst_21 : f32 to vector<8x64xf32>
    %26 = arith.maximumf %24, %25 : vector<8x64xf32>
    %27 = math.absf %24 : vector<8x64xf32>
    %cst_22 = arith.constant 0.000000e+00 : f32
    %28 = vector.broadcast %cst_22 : f32 to vector<8x64xf32>
    %29 = arith.subf %28, %27 : vector<8x64xf32>
    %30 = math.exp %29 : vector<8x64xf32>
    %cst_23 = arith.constant 1.000000e+00 : f32
    %31 = vector.broadcast %cst_23 : f32 to vector<8x64xf32>
    %32 = arith.addf %31, %30 : vector<8x64xf32>
    %33 = math.log %32 : vector<8x64xf32>
    %34 = arith.addf %26, %33 : vector<8x64xf32>
    %35 = math.tanh %34 : vector<8x64xf32>
    %36 = arith.mulf %24, %35 : vector<8x64xf32>
    %c0_24 = arith.constant 0 : index
    %c0_25 = arith.constant 0 : index
    %37 = vector.load %arg10[%c0_24, %c0_25] : memref<64x64xf32, #tpu.memory_space<vmem>>, vector<64x64xf32>
    %c0_26 = arith.constant 0 : index
    %c0_27 = arith.constant 0 : index
    %38 = vector.load %arg11[%c0_26, %c0_27] : memref<1x64xf32, #tpu.memory_space<vmem>>, vector<1x64xf32>
    %cst_28 = arith.constant dense<0.000000e+00> : vector<8x64xf32>
    %39 = tpu.matmul %36, %37, %cst_28 {dimension_numbers = #tpu.dot_dimension_numbers<[1], [0], [0], [1], [0, 0, 1, 1], [], []>} : vector<8x64xf32>, vector<64x64xf32>, vector<8x64xf32> -> vector<8x64xf32>
    %40 = vector.broadcast %38 : vector<1x64xf32> to vector<8x64xf32>
    %41 = arith.addf %39, %40 : vector<8x64xf32>
    %cst_29 = arith.constant 0.000000e+00 : f32
    %42 = vector.broadcast %cst_29 : f32 to vector<8x64xf32>
    %43 = arith.maximumf %41, %42 : vector<8x64xf32>
    %44 = math.absf %41 : vector<8x64xf32>
    %cst_30 = arith.constant 0.000000e+00 : f32
    %45 = vector.broadcast %cst_30 : f32 to vector<8x64xf32>
    %46 = arith.subf %45, %44 : vector<8x64xf32>
    %47 = math.exp %46 : vector<8x64xf32>
    %cst_31 = arith.constant 1.000000e+00 : f32
    %48 = vector.broadcast %cst_31 : f32 to vector<8x64xf32>
    %49 = arith.addf %48, %47 : vector<8x64xf32>
    %50 = math.log %49 : vector<8x64xf32>
    %51 = arith.addf %43, %50 : vector<8x64xf32>
    %52 = math.tanh %51 : vector<8x64xf32>
    %53 = arith.mulf %41, %52 : vector<8x64xf32>
    %c0_32 = arith.constant 0 : index
    %c0_33 = arith.constant 0 : index
    %54 = vector.load %arg12[%c0_32, %c0_33] : memref<64x16xf32, #tpu.memory_space<vmem>>, vector<64x16xf32>
    %c0_34 = arith.constant 0 : index
    %c0_35 = arith.constant 0 : index
    %55 = vector.load %arg13[%c0_34, %c0_35] : memref<1x16xf32, #tpu.memory_space<vmem>>, vector<1x16xf32>
    %cst_36 = arith.constant dense<0.000000e+00> : vector<8x16xf32>
    %56 = tpu.matmul %53, %54, %cst_36 {dimension_numbers = #tpu.dot_dimension_numbers<[1], [0], [0], [1], [0, 0, 1, 1], [], []>} : vector<8x64xf32>, vector<64x16xf32>, vector<8x16xf32> -> vector<8x16xf32>
    %57 = vector.broadcast %55 : vector<1x16xf32> to vector<8x16xf32>
    %58 = arith.addf %56, %57 : vector<8x16xf32>
    %c0_37 = arith.constant 0 : index
    %c0_38 = arith.constant 0 : index
    %59 = vector.load %arg14[%c0_37, %c0_38] : memref<8x16xf32, #tpu.memory_space<vmem>>, vector<8x16xf32>
    tpu.vector_store %arg14[%c0_37, %c0_38], %58 {strides = array<i32>} : memref<8x16xf32, #tpu.memory_space<vmem>>, vector<8x16xf32>,
    return
  }
  func.func @transform_0(%arg0: i32) -> (i32, i32) {
    %c0_i32 = arith.constant 0 : i32
    %c0_i32_0 = arith.constant 0 : i32
    return %arg0, %c0_i32 : i32, i32
  }
  func.func @transform_1(%arg0: i32) -> (i32, i32) {
    %c0_i32 = arith.constant 0 : i32
    %c0_i32_0 = arith.constant 0 : i32
    return %arg0, %c0_i32 : i32, i32
  }
  func.func @transform_2(%arg0: i32) -> (i32, i32) {
    %c0_i32 = arith.constant 0 : i32
    %c0_i32_0 = arith.constant 0 : i32
    return %arg0, %c0_i32 : i32, i32
  }
  func.func @transform_3(%arg0: i32) -> (i32, i32) {
    %c0_i32 = arith.constant 0 : i32
    %c0_i32_0 = arith.constant 0 : i32
    %c0_i32_1 = arith.constant 0 : i32
    return %c0_i32, %c0_i32_0 : i32, i32
  }
  func.func @transform_4(%arg0: i32) -> (i32, i32) {
    %c0_i32 = arith.constant 0 : i32
    %c0_i32_0 = arith.constant 0 : i32
    %c0_i32_1 = arith.constant 0 : i32
    return %c0_i32, %c0_i32_0 : i32, i32
  }
  func.func @transform_5(%arg0: i32) -> (i32, i32) {
    %c0_i32 = arith.constant 0 : i32
    %c0_i32_0 = arith.constant 0 : i32
    %c0_i32_1 = arith.constant 0 : i32
    return %c0_i32, %c0_i32_0 : i32, i32
  }
  func.func @transform_6(%arg0: i32) -> (i32, i32) {
    %c0_i32 = arith.constant 0 : i32
    %c0_i32_0 = arith.constant 0 : i32
    %c0_i32_1 = arith.constant 0 : i32
    return %c0_i32, %c0_i32_0 : i32, i32
  }
  func.func @transform_7(%arg0: i32) -> (i32, i32) {
    %c0_i32 = arith.constant 0 : i32
    %c0_i32_0 = arith.constant 0 : i32
    %c0_i32_1 = arith.constant 0 : i32
    return %c0_i32, %c0_i32_0 : i32, i32
  }
  func.func @transform_8(%arg0: i32) -> (i32, i32) {
    %c0_i32 = arith.constant 0 : i32
    %c0_i32_0 = arith.constant 0 : i32
    %c0_i32_1 = arith.constant 0 : i32
    return %c0_i32, %c0_i32_0 : i32, i32
  }
  func.func @transform_9(%arg0: i32) -> (i32, i32) {
    %c0_i32 = arith.constant 0 : i32
    %c0_i32_0 = arith.constant 0 : i32
    %c0_i32_1 = arith.constant 0 : i32
    return %c0_i32, %c0_i32_0 : i32, i32
  }
  func.func @transform_10(%arg0: i32) -> (i32, i32) {
    %c0_i32 = arith.constant 0 : i32
    %c0_i32_0 = arith.constant 0 : i32
    %c0_i32_1 = arith.constant 0 : i32
    return %c0_i32, %c0_i32_0 : i32, i32
  }
  func.func @transform_11(%arg0: i32) -> (i32, i32) {
    %c0_i32 = arith.constant 0 : i32
    %c0_i32_0 = arith.constant 0 : i32
    %c0_i32_1 = arith.constant 0 : i32
    return %c0_i32, %c0_i32_0 : i32, i32
  }
  func.func @transform_12(%arg0: i32) -> (i32, i32) {
    %c0_i32 = arith.constant 0 : i32
    %c0_i32_0 = arith.constant 0 : i32
    %c0_i32_1 = arith.constant 0 : i32
    return %c0_i32, %c0_i32_0 : i32, i32
  }
  func.func @transform_13(%arg0: i32) -> (i32, i32) {
    %c0_i32 = arith.constant 0 : i32
    %c0_i32_0 = arith.constant 0 : i32
    return %arg0, %c0_i32 : i32, i32
  }
}

</mosaic_0001>

<llo_original>
// kernel: tpu_custom_call.1
$region0: #{tpu_custom_call.1}
  #allocation0 [shape = 'u32[]', space=smem, size = 0x4, offset = 0x4, fixed_abs, tag = 'smem constant byte address 0x4 - core index']
  #allocation1 [shape = 'u32[144,128]{1,0:T(1,128)}', space=vmem, size = 0x12000, scoped, tag = 'internal scratch']
  %s0 = inlined_call_operand.vmem [shape: f32[8,1], index: 0, kind: input, shape index: {}]
  %s1 = inlined_call_operand.vmem [shape: f32[8,16], index: 1, kind: input, shape index: {}]
  %s2 = inlined_call_operand.hbm [shape: f32[8,8], index: 2, kind: input, shape index: {}]
  %s3 = inlined_call_operand.vmem [shape: f32[1,16], index: 3, kind: input, shape index: {}]
  %s4 = inlined_call_operand.vmem [shape: f32[16,64], index: 4, kind: input, shape index: {}]
  %s5 = inlined_call_operand.hbm [shape: f32[8,64], index: 5, kind: input, shape index: {}]
  %s6 = inlined_call_operand.vmem [shape: f32[16,64], index: 6, kind: input, shape index: {}]
  %s7 = inlined_call_operand.hbm [shape: f32[16,64], index: 7, kind: input, shape index: {}]
  %s8 = inlined_call_operand.vmem [shape: f32[1,64], index: 8, kind: input, shape index: {}]
  %s9 = inlined_call_operand.vmem [shape: f32[64,64], index: 9, kind: input, shape index: {}]
  %s10 = inlined_call_operand.vmem [shape: f32[1,64], index: 10, kind: input, shape index: {}]
  %s11 = inlined_call_operand.vmem [shape: f32[64,16], index: 11, kind: input, shape index: {}]
  %s12 = inlined_call_operand.vmem [shape: f32[1,16], index: 12, kind: input, shape index: {}]
  %s13 = inlined_call_operand.hbm [shape: f32[8,16], index: 13, kind: output, shape index: {}]
  %s14 = sld [smem:[#allocation0]]
  $region74: #{tpu_custom_call.1} parent=0
    _
  %s16 = ssub.s32 1, %s14
  %s17 = scalar_select 0, %s16, %s14
  $region1: #{tpu_custom_call.1} parent=0
    #allocation2 [shape = 'u8[4096]{0}', space=vmem, size = 0x1000, scoped, tag = 'input window, operand 2, single buffered']
    #allocation3 [shape = 's32[1]{0}', space=sflag, size = 0x4, scoped, tag = 'scoped memory for tpu_custom_call.1']
    #allocation4 [shape = 's32[1]{0}', space=sflag, size = 0x4, scoped, tag = 'scoped memory for tpu_custom_call.1']
    #allocation5 [shape = 'u8[4096]{0}', space=vmem, size = 0x1000, scoped, tag = 'input window, operand 5, single buffered']
    #allocation6 [shape = 's32[1]{0}', space=sflag, size = 0x4, scoped, tag = 'scoped memory for tpu_custom_call.1']
    #allocation7 [shape = 'u8[8192]{0}', space=vmem, size = 0x2000, scoped, tag = 'input window, operand 7, single buffered']
    #allocation8 [shape = 'u8[4096]{0}', space=vmem, size = 0x1000, scoped, tag = 'output window, operand 0, single buffered']
    %18 = vsyncpa [#allocation3], 0
    %19 = vsyncpa [#allocation6], 0
    %20 = vsyncpa [#allocation4], 0
    // Predicated region
    $region2: #{tpu_custom_call.1} parent=1 // pred_check
      _
    $region3: #{tpu_custom_call.1} parent=1 // pred_check_branch
      %22 = sbr.rel (0) target = $region5
    $region4: #{tpu_custom_call.1} parent=1 // pred_region
      _
    $region5: #{tpu_custom_call.1} parent=1 // pred_fallthru
      _
    // Predicated region
    $region6: #{tpu_custom_call.1} parent=1 // pred_check
      _
    $region7: #{tpu_custom_call.1} parent=1 // pred_check_branch
      %24 = sbr.rel (0) target = $region9
    $region8: #{tpu_custom_call.1} parent=1 // pred_region
      _
    $region9: #{tpu_custom_call.1} parent=1 // pred_fallthru
      _
    // Predicated region
    $region10: #{tpu_custom_call.1} parent=1 // pred_check
      _
    $region11: #{tpu_custom_call.1} parent=1 // pred_check_branch
      %26 = sbr.rel (0) target = $region13
    $region12: #{tpu_custom_call.1} parent=1 // pred_region
      %s28 = ssub.s32 128, 128
      %29 = vsyncadd [#allocation3], %s28
      %s31 = sshll.u32 [#allocation2], 4
      %s32 = int_to_ptr.vmem [resolvable:$true] %s31
      %34 = dma.hbm_to_vmem [thread:$0]  %s2, 128, %s32, [#allocation3]
    $region13: #{tpu_custom_call.1} parent=1 // pred_fallthru
      _
    // Predicated region
    $region14: #{tpu_custom_call.1} parent=1 // pred_check
      _
    $region15: #{tpu_custom_call.1} parent=1 // pred_check_branch
      %36 = sbr.rel (0) target = $region17
    $region16: #{tpu_custom_call.1} parent=1 // pred_region
      _
    $region17: #{tpu_custom_call.1} parent=1 // pred_fallthru
      _
    // Predicated region
    $region18: #{tpu_custom_call.1} parent=1 // pred_check
      _
    $region19: #{tpu_custom_call.1} parent=1 // pred_check_branch
      %38 = sbr.rel (0) target = $region21
    $region20: #{tpu_custom_call.1} parent=1 // pred_region
      _
    $region21: #{tpu_custom_call.1} parent=1 // pred_fallthru
      _
    // Predicated region
    $region22: #{tpu_custom_call.1} parent=1 // pred_check
      _
    $region23: #{tpu_custom_call.1} parent=1 // pred_check_branch
      %40 = sbr.rel (0) target = $region25
    $region24: #{tpu_custom_call.1} parent=1 // pred_region
      %s42 = ssub.s32 128, 128
      %43 = vsyncadd [#allocation6], %s42
      %s45 = sshll.u32 [#allocation5], 4
      %s46 = int_to_ptr.vmem [resolvable:$true] %s45
      %48 = dma.hbm_to_vmem [thread:$0]  %s5, 128, %s46, [#allocation6]
    $region25: #{tpu_custom_call.1} parent=1 // pred_fallthru
      _
    // Predicated region
    $region26: #{tpu_custom_call.1} parent=1 // pred_check
      _
    $region27: #{tpu_custom_call.1} parent=1 // pred_check_branch
      %50 = sbr.rel (0) target = $region29
    $region28: #{tpu_custom_call.1} parent=1 // pred_region
      _
    $region29: #{tpu_custom_call.1} parent=1 // pred_fallthru
      _
    // Predicated region
    $region30: #{tpu_custom_call.1} parent=1 // pred_check
      _
    $region31: #{tpu_custom_call.1} parent=1 // pred_check_branch
      %52 = sbr.rel (0) target = $region33
    $region32: #{tpu_custom_call.1} parent=1 // pred_region
      %s54 = ssub.s32 256, 256
      %55 = vsyncadd [#allocation6], %s54
      %s56 = sshll.u32 [#allocation7], 4
      %s57 = int_to_ptr.vmem [resolvable:$true] %s56
      %62 = dma.hbm_to_vmem [thread:$0]  %s7, 256, %s57, [#allocation6], 128, 128, 8
    $region33: #{tpu_custom_call.1} parent=1 // pred_fallthru
      _
    // Predicated region
    $region34: #{tpu_custom_call.1} parent=1 // pred_check
      _
    $region35: #{tpu_custom_call.1} parent=1 // pred_check_branch
      %64 = sbr.rel (0) target = $region37
    $region36: #{tpu_custom_call.1} parent=1 // pred_region
      _
    $region37: #{tpu_custom_call.1} parent=1 // pred_fallthru
      _
    // Predicated region
    $region38: #{tpu_custom_call.1} parent=1 // pred_check
      _
    $region39: #{tpu_custom_call.1} parent=1 // pred_check_branch
      %66 = sbr.rel (0) target = $region41
    $region40: #{tpu_custom_call.1} parent=1 // pred_region
      _
    $region41: #{tpu_custom_call.1} parent=1 // pred_fallthru
      _
    // Predicated region
    $region42: #{tpu_custom_call.1} parent=1 // pred_check
      _
    $region43: #{tpu_custom_call.1} parent=1 // pred_check_branch
      %68 = sbr.rel (0) target = $region45
    $region44: #{tpu_custom_call.1} parent=1 // pred_region
      _
    $region45: #{tpu_custom_call.1} parent=1 // pred_fallthru
      _
    // Predicated region
    $region46: #{tpu_custom_call.1} parent=1 // pred_check
      _
    $region47: #{tpu_custom_call.1} parent=1 // pred_check_branch
      %70 = sbr.rel (0) target = $region49
    $region48: #{tpu_custom_call.1} parent=1 // pred_region
      _
    $region49: #{tpu_custom_call.1} parent=1 // pred_fallthru
      _
    // Predicated region
    $region50: #{tpu_custom_call.1} parent=1 // pred_check
      _
    $region51: #{tpu_custom_call.1} parent=1 // pred_check_branch
      %72 = sbr.rel (0) target = $region53
    $region52: #{tpu_custom_call.1} parent=1 // pred_region
      _
    $region53: #{tpu_custom_call.1} parent=1 // pred_fallthru
      _
    // Predicated region
    $region54: #{tpu_custom_call.1} parent=1 // pred_check
      _
    $region55: #{tpu_custom_call.1} parent=1 // pred_check_branch
      %74 = sbr.rel (0) target = $region57
    $region56: #{tpu_custom_call.1} parent=1 // pred_region
      %75 = dma.done [#allocation3], 128
    $region57: #{tpu_custom_call.1} parent=1 // pred_fallthru
      _
    // Predicated region
    $region58: #{tpu_custom_call.1} parent=1 // pred_check
      _
    $region59: #{tpu_custom_call.1} parent=1 // pred_check_branch
      %77 = sbr.rel (0) target = $region61
    $region60: #{tpu_custom_call.1} parent=1 // pred_region
      %78 = dma.done [#allocation6], 128
    $region61: #{tpu_custom_call.1} parent=1 // pred_fallthru
      _
    // Predicated region
    $region62: #{tpu_custom_call.1} parent=1 // pred_check
      _
    $region63: #{tpu_custom_call.1} parent=1 // pred_check_branch
      %80 = sbr.rel (0) target = $region65
    $region64: #{tpu_custom_call.1} parent=1 // pred_region
      %81 = dma.done [#allocation6], 256
    $region65: #{tpu_custom_call.1} parent=1 // pred_fallthru
      _
    %v82 = vld [vmem:[%s0] sm:$0xff]
    %v83 = vld [vmem:[%s1] sm:$0xff]
    %v84 = vld [vmem:[#allocation2] sm:$0xff]
    %v85 = vld [vmem:[%s3] sm:$0x1]
    %v86 = vld [vmem:[%s4] sm:$0xff]
    %v87 = vld [vmem:[%s4 + $0x8] sm:$0xff]
    %v88 = vld [vmem:[#allocation5] sm:$0xff]
    %v89 = vld [vmem:[%s6] sm:$0xff]
    %v90 = vld [vmem:[%s6 + $0x8] sm:$0xff]
    %v91 = vld [vmem:[#allocation7] sm:$0xff]
    %v92 = vld [vmem:[#allocation7 + $0x8] sm:$0xff]
    %v93 = vld [vmem:[%s8] sm:$0x1]
    %v94 = vmul.f32 %v85, 6.2831855
    %96 = vset.pattern.permute.xlu0 0
    %97 = vperm.xlu0 %96, %v82
    %v98 = vpop.permute.xlu0 %97
    %v101 = vlaneseq
    %v102 = vshrl.u32 %v101, 7
    %v103 = vsub.s32 0, %v102
    %v104 = vrot.slane %v94, %v103
    %v106 = vmul.f32 %v98, %v104
    %v107 = vand.u32 2147483647, %v106
    %vm108 = vcmp.le.f32.partialorder %v107, 0.7853982
    %vm109 = vcmp.lt.s32.totalorder %v106, 0
    %v110 = vand.u32 %v106, 2139095040
    %v111 = vshrl.u32 %v110, 23
    %v112 = vsub.s32 %v111, 127
    %v113 = vand.u32 2147483647, %v106
    %v114 = vand.u32 %v113, 8388607
    %v115 = vor.u32 %v114, 8388608
    %v116 = vsub.s32 0, %v115
    %v117 = vadd.s32 %v112, 1
    %vm118 = vcmp.gt.s32.totalorder %v117, 0
    %v119 = vsel %vm118, %v117, 0
    %v120 = vshrl.u32 %v119, 5
    %v121 = vand.u32 %v119, 31
    %v122 = vsub.s32 32, %v121
    %v123 = vshrl.u32 683565275, %v122
    %v124 = vshll.u32 683565275, %v121
    %v125 = vshrl.u32 2475754826, %v122
    %v126 = vor.u32 %v124, %v125
    %v127 = vshll.u32 2475754826, %v121
    %v128 = vshrl.u32 2131351028, %v122
    %v129 = vor.u32 %v127, %v128
    %v130 = vshll.u32 2131351028, %v121
    %v131 = vshrl.u32 2102212464, %v122
    %v132 = vor.u32 %v130, %v131
    %v133 = vshll.u32 2102212464, %v121
    %v134 = vshrl.u32 920167782, %v122
    %v135 = vor.u32 %v133, %v134
    %v136 = vshll.u32 920167782, %v121
    %v137 = vshrl.u32 1326507024, %v122
    %v138 = vor.u32 %v136, %v137
    %vm139 = vcmp.lt.s32.totalorder %v120, 1
    %vm140 = vcmp.lt.s32.totalorder %v120, 2
    %vm141 = vcmp.lt.s32.totalorder %v120, 3
    %vm142 = vcmp.lt.s32.totalorder %v120, 4
    %v143 = vsel %vm139, %v123, %v126
    %v144 = vsel %vm142, %v132, 2102212464
    %v145 = vsel %vm141, %v129, %v144
    %v146 = vsel %vm140, %v143, %v145
    %v147 = vsel %vm139, %v126, %v129
    %v148 = vsel %vm142, %v135, 920167782
    %v149 = vsel %vm141, %v132, %v148
    %v150 = vsel %vm140, %v147, %v149
    %v151 = vsel %vm139, %v129, %v132
    %v152 = vsel %vm142, %v138, 1326507024
    %v153 = vsel %vm141, %v135, %v152
    %v154 = vsel %vm140, %v151, %v153
    %v155 = vshll.u32 %v115, 8
    %v156 = vmul.u32.u64.compose %v155, %v154
    %v157 = vextract.low.u32 %v156
    %v158 = vextract.high.u32 %v156
    %v159 = vmul.u32.u64.compose %v155, %v150
    %v160 = vextract.low.u32 %v159
    %v161 = vextract.high.u32 %v159
    %v162 = vmul.u32 %v155, %v146
    %v163 = vadd.s32 %v158, %v160
    %vm164 = vc.u32 %v158, %v160
    %v165 = vadd.s32 %v161, 1
    %v166 = vsel %vm164, %v165, %v161
    %v167 = vadd.s32 %v162, %v166
    %v168 = vadd.s32 %v167, 536870912
    %v169 = vshrl.u32 %v168, 30
    %v170 = vshll.u32 %v169, 30
    %v171 = vsub.s32 %v167, %v170
    %vm172 = vcmp.lt.s32.totalorder %v171, 0
    %v173 = vsub.s32 0, %v171
    %v174 = vsel %vm172, %v173, %v171
    %v175 = vclz %v174
    %v176 = vsub.s32 %v175, 2
    %vm177 = vcmp.gt.s32.totalorder 0, %v176
    %v178 = vsel %vm177, 0, %v176
    %v179 = vsub.s32 32, %v178
    %v180 = vshll.u32 %v171, %v178
    %v181 = vshrl.u32 %v163, %v179
    %v182 = vor.u32 %v180, %v181
    %v183 = vsub.s32 4294967266, %v178
    %v184 = vadd.s32 %v183, 127
    %v185 = vshll.u32 %v184, 23
    %v186 = vor.u32 4788187, %v185
    %v187 = vand.u32 2147483647, %v186
    %v189 = vcvt.s32.f32 %v182
    %v190 = vmul.f32 %v189, %v187
    %v191 = vxor.u32 %v190, 2147483648
    %v192 = vsel %vm109, %v191, %v190
    %v193 = vsub.s32 4, %v169
    %v194 = vsel %vm109, %v193, %v169
    %v195 = vsel %vm108, %v106, %v192
    %v196 = vsel %vm108, 0, %v194
    %v197 = vcosq.f32.pop %v195
    %v198 = vsinq.f32.pop %v195
    %vm199 = vweird.f32 %v106
    %v200 = vadd.s32 %v196, 3
    %v201 = vand.u32 %v200, 3
    %vm202 = vcmp.lt.s32.totalorder %v201, 2
    %vm203 = vcmp.eq.s32.totalorder %v201, 0
    %v204 = vxor.u32 %v198, 2147483648
    %v205 = vsel %vm203, %v197, %v204
    %vm206 = vcmp.eq.s32.totalorder %v201, 2
    %v207 = vxor.u32 %v197, 2147483648
    %v208 = vsel %vm206, %v207, %v198
    %v209 = vsel %vm202, %v205, %v208
    %v210 = vsel %vm199, nan, %v209
    %v211 = vand.u32 2147483647, %v106
    %vm212 = vcmp.le.f32.partialorder %v211, 0.7853982
    %vm213 = vcmp.lt.s32.totalorder %v106, 0
    %v214 = vand.u32 %v106, 2139095040
    %v215 = vshrl.u32 %v214, 23
    %v216 = vsub.s32 %v215, 127
    %v217 = vand.u32 2147483647, %v106
    %v218 = vand.u32 %v217, 8388607
    %v219 = vor.u32 %v218, 8388608
    %v220 = vsub.s32 0, %v219
    %v221 = vadd.s32 %v216, 1
    %vm222 = vcmp.gt.s32.totalorder %v221, 0
    %v223 = vsel %vm222, %v221, 0
    %v224 = vshrl.u32 %v223, 5
    %v225 = vand.u32 %v223, 31
    %v226 = vsub.s32 32, %v225
    %v227 = vshrl.u32 683565275, %v226
    %v228 = vshll.u32 683565275, %v225
    %v229 = vshrl.u32 2475754826, %v226
    %v230 = vor.u32 %v228, %v229
    %v231 = vshll.u32 2475754826, %v225
    %v232 = vshrl.u32 2131351028, %v226
    %v233 = vor.u32 %v231, %v232
    %v234 = vshll.u32 2131351028, %v225
    %v235 = vshrl.u32 2102212464, %v226
    %v236 = vor.u32 %v234, %v235
    %v237 = vshll.u32 2102212464, %v225
    %v238 = vshrl.u32 920167782, %v226
    %v239 = vor.u32 %v237, %v238
    %v240 = vshll.u32 920167782, %v225
    %v241 = vshrl.u32 1326507024, %v226
    %v242 = vor.u32 %v240, %v241
    %vm243 = vcmp.lt.s32.totalorder %v224, 1
    %vm244 = vcmp.lt.s32.totalorder %v224, 2
    %vm245 = vcmp.lt.s32.totalorder %v224, 3
    %vm246 = vcmp.lt.s32.totalorder %v224, 4
    %v247 = vsel %vm243, %v227, %v230
    %v248 = vsel %vm246, %v236, 2102212464
    %v249 = vsel %vm245, %v233, %v248
    %v250 = vsel %vm244, %v247, %v249
    %v251 = vsel %vm243, %v230, %v233
    %v252 = vsel %vm246, %v239, 920167782
    %v253 = vsel %vm245, %v236, %v252
    %v254 = vsel %vm244, %v251, %v253
    %v255 = vsel %vm243, %v233, %v236
    %v256 = vsel %vm246, %v242, 1326507024
    %v257 = vsel %vm245, %v239, %v256
    %v258 = vsel %vm244, %v255, %v257
    %v259 = vshll.u32 %v219, 8
    %v260 = vmul.u32.u64.compose %v259, %v258
    %v261 = vextract.low.u32 %v260
    %v262 = vextract.high.u32 %v260
    %v263 = vmul.u32.u64.compose %v259, %v254
    %v264 = vextract.low.u32 %v263
    %v265 = vextract.high.u32 %v263
    %v266 = vmul.u32 %v259, %v250
    %v267 = vadd.s32 %v262, %v264
    %vm268 = vc.u32 %v262, %v264
    %v269 = vadd.s32 %v265, 1
    %v270 = vsel %vm268, %v269, %v265
    %v271 = vadd.s32 %v266, %v270
    %v272 = vadd.s32 %v271, 536870912
    %v273 = vshrl.u32 %v272, 30
    %v274 = vshll.u32 %v273, 30
    %v275 = vsub.s32 %v271, %v274
    %vm276 = vcmp.lt.s32.totalorder %v275, 0
    %v277 = vsub.s32 0, %v275
    %v278 = vsel %vm276, %v277, %v275
    %v279 = vclz %v278
    %v280 = vsub.s32 %v279, 2
    %vm281 = vcmp.gt.s32.totalorder 0, %v280
    %v282 = vsel %vm281, 0, %v280
    %v283 = vsub.s32 32, %v282
    %v284 = vshll.u32 %v275, %v282
    %v285 = vshrl.u32 %v267, %v283
    %v286 = vor.u32 %v284, %v285
    %v287 = vsub.s32 4294967266, %v282
    %v288 = vadd.s32 %v287, 127
    %v289 = vshll.u32 %v288, 23
    %v290 = vor.u32 4788187, %v289
    %v291 = vand.u32 2147483647, %v290
    %v293 = vcvt.s32.f32 %v286
    %v294 = vmul.f32 %v293, %v291
    %v295 = vxor.u32 %v294, 2147483648
    %v296 = vsel %vm213, %v295, %v294
    %v297 = vsub.s32 4, %v273
    %v298 = vsel %vm213, %v297, %v273
    %v299 = vsel %vm212, %v106, %v296
    %v300 = vsel %vm212, 0, %v298
    %v301 = vcosq.f32.pop %v299
    %v302 = vsinq.f32.pop %v299
    %vm303 = vweird.f32 %v106
    %v304 = vand.u32 %v300, 3
    %vm305 = vcmp.lt.s32.totalorder %v304, 2
    %vm306 = vcmp.eq.s32.totalorder %v304, 0
    %v307 = vxor.u32 %v302, 2147483648
    %v308 = vsel %vm306, %v301, %v307
    %vm309 = vcmp.eq.s32.totalorder %v304, 2
    %v310 = vxor.u32 %v301, 2147483648
    %v311 = vsel %vm309, %v310, %v302
    %v312 = vsel %vm305, %v308, %v311
    %v313 = vsel %vm303, nan, %v312
    %vm314 = vcmask 64512
    %v316 = vsel %vm314, %v84, 0
    %318 = vmatprep.subr.mxu0 0.0
    %319 = vmatpush1.msra.mxu0 %v88
    %320 = vmatprep.subr.mxu0 0.0
    %321 = vmatpush1.msra.mxu0 0.0
    %322 = vmatprep.subr.mxu0 0.0
    %323 = vmatpush1.msra.mxu0 0.0
    %324 = vmatprep.subr.mxu0 0.0
    %325 = vmatpush1.msra.mxu0 0.0
    %326 = vmatprep.subr.mxu0 0.0
    %327 = vmatpush1.msra.mxu0 0.0
    %328 = vmatprep.subr.mxu0 0.0
    %329 = vmatpush1.msra.mxu0 0.0
    %330 = vmatprep.subr.mxu0 0.0
    %331 = vmatpush1.msra.mxu0 0.0
    %332 = vmatprep.subr.mxu0 0.0
    %333 = vmatpush1.msra.mxu0 0.0
    %334 = vmatprep.subr.mxu0 0.0
    %335 = vmatpush1.msra.mxu0 0.0
    %336 = vmatprep.subr.mxu0 0.0
    %337 = vmatpush1.msra.mxu0 0.0
    %338 = vmatprep.subr.mxu0 0.0
    %339 = vmatpush1.msra.mxu0 0.0
    %340 = vmatprep.subr.mxu0 0.0
    %341 = vmatpush1.msra.mxu0 0.0
    %342 = vmatprep.subr.mxu0 0.0
    %343 = vmatpush1.msra.mxu0 0.0
    %344 = vmatprep.subr.mxu0 0.0
    %345 = vmatpush1.msra.mxu0 0.0
    %346 = vmatprep.subr.mxu0 0.0
    %347 = vmatpush1.msra.mxu0 0.0
    %348 = vmatprep.subr.mxu0 0.0
    %349 = vmatpush1.msra.mxu0 0.0
    %350 = vmatprep.subr.mxu0 0.0
    %351 = vmatpush1.msra.mxu0 0.0
    %352 = vmatprep.subr.mxu0 0.0
    %353 = vmatpush1.msra.mxu0 0.0
    %354 = vmatprep.subr.mxu0 0.0
    %355 = vmatpush1.msra.mxu0 0.0
    %356 = vmatprep.subr.mxu0 0.0
    %357 = vmatpush1.msra.mxu0 0.0
    %358 = vmatprep.subr.mxu0 0.0
    %359 = vmatpush1.msra.mxu0 0.0
    %360 = vmatprep.subr.mxu0 0.0
    %361 = vmatpush1.msra.mxu0 0.0
    %362 = vmatprep.subr.mxu0 0.0
    %363 = vmatpush1.msra.mxu0 0.0
    %364 = vmatprep.subr.mxu0 0.0
    %365 = vmatpush1.msra.mxu0 0.0
    %366 = vmatprep.subr.mxu0 0.0
    %367 = vmatpush1.msra.mxu0 0.0
    %368 = vmatprep.subr.mxu0 0.0
    %369 = vmatpush1.msra.mxu0 0.0
    %370 = vmatprep.subr.mxu0 0.0
    %371 = vmatpush1.msra.mxu0 0.0
    %372 = vmatprep.subr.mxu0 0.0
    %373 = vmatpush1.msra.mxu0 0.0
    %374 = vmatprep.subr.mxu0 0.0
    %375 = vmatpush1.msra.mxu0 0.0
    %376 = vmatprep.subr.mxu0 0.0
    %377 = vmatpush1.msra.mxu0 0.0
    %378 = vmatprep.subr.mxu0 0.0
    %379 = vmatpush1.msra.mxu0 0.0
    %380 = vmatprep.subr.mxu0 0.0
    %381 = vmatpush1.msra.mxu0 0.0
    %382 = vmatprep.mubr.f32.mxu0 0.0
    %383 = vmatmul.mubr.f32.gmra.mrb[0].mxu0 %v316
    %v384 = vpop.f32.mrb[0].mxu0
    %v385 = vadd.f32 0.0, %v384
    %v386 = vpop.f32.mrb[0].mxu0
    %387 = vdwg.mxu0
    %vm388 = vcmask 130048
    %v390 = vsel %vm388, %v83, 0
    %392 = vmatprep.subr.mxu0 0.0
    %393 = vmatpush1.msra.mxu0 %v86
    %394 = vmatprep.subr.mxu0 0.0
    %395 = vmatpush1.msra.mxu0 %v87
    %396 = vmatprep.subr.mxu0 0.0
    %397 = vmatpush1.msra.mxu0 0.0
    %398 = vmatprep.subr.mxu0 0.0
    %399 = vmatpush1.msra.mxu0 0.0
    %400 = vmatprep.subr.mxu0 0.0
    %401 = vmatpush1.msra.mxu0 0.0
    %402 = vmatprep.subr.mxu0 0.0
    %403 = vmatpush1.msra.mxu0 0.0
    %404 = vmatprep.subr.mxu0 0.0
    %405 = vmatpush1.msra.mxu0 0.0
    %406 = vmatprep.subr.mxu0 0.0
    %407 = vmatpush1.msra.mxu0 0.0
    %408 = vmatprep.subr.mxu0 0.0
    %409 = vmatpush1.msra.mxu0 0.0
    %410 = vmatprep.subr.mxu0 0.0
    %411 = vmatpush1.msra.mxu0 0.0
    %412 = vmatprep.subr.mxu0 0.0
    %413 = vmatpush1.msra.mxu0 0.0
    %414 = vmatprep.subr.mxu0 0.0
    %415 = vmatpush1.msra.mxu0 0.0
    %416 = vmatprep.subr.mxu0 0.0
    %417 = vmatpush1.msra.mxu0 0.0
    %418 = vmatprep.subr.mxu0 0.0
    %419 = vmatpush1.msra.mxu0 0.0
    %420 = vmatprep.subr.mxu0 0.0
    %421 = vmatpush1.msra.mxu0 0.0
    %422 = vmatprep.subr.mxu0 0.0
    %423 = vmatpush1.msra.mxu0 0.0
    %424 = vmatprep.subr.mxu0 0.0
    %425 = vmatpush1.msra.mxu0 0.0
    %426 = vmatprep.subr.mxu0 0.0
    %427 = vmatpush1.msra.mxu0 0.0
    %428 = vmatprep.subr.mxu0 0.0
    %429 = vmatpush1.msra.mxu0 0.0
    %430 = vmatprep.subr.mxu0 0.0
    %431 = vmatpush1.msra.mxu0 0.0
    %432 = vmatprep.subr.mxu0 0.0
    %433 = vmatpush1.msra.mxu0 0.0
    %434 = vmatprep.subr.mxu0 0.0
    %435 = vmatpush1.msra.mxu0 0.0
    %436 = vmatprep.subr.mxu0 0.0
    %437 = vmatpush1.msra.mxu0 0.0
    %438 = vmatprep.subr.mxu0 0.0
    %439 = vmatpush1.msra.mxu0 0.0
    %440 = vmatprep.subr.mxu0 0.0
    %441 = vmatpush1.msra.mxu0 0.0
    %442 = vmatprep.subr.mxu0 0.0
    %443 = vmatpush1.msra.mxu0 0.0
    %444 = vmatprep.subr.mxu0 0.0
    %445 = vmatpush1.msra.mxu0 0.0
    %446 = vmatprep.subr.mxu0 0.0
    %447 = vmatpush1.msra.mxu0 0.0
    %448 = vmatprep.subr.mxu0 0.0
    %449 = vmatpush1.msra.mxu0 0.0
    %450 = vmatprep.subr.mxu0 0.0
    %451 = vmatpush1.msra.mxu0 0.0
    %452 = vmatprep.subr.mxu0 0.0
    %453 = vmatpush1.msra.mxu0 0.0
    %454 = vmatprep.subr.mxu0 0.0
    %455 = vmatpush1.msra.mxu0 0.0
    %456 = vmatprep.mubr.f32.mxu0 0.0
    %457 = vmatmul.mubr.f32.gmra.mrb[0].mxu0 %v390
    %v458 = vpop.f32.mrb[0].mxu0
    %v459 = vadd.f32 %v385, %v458
    %v460 = vpop.f32.mrb[0].mxu0
    %461 = vdwg.mxu0
    %v463 = vsel %vm388, %v210, 0
    %465 = vmatprep.subr.mxu0 0.0
    %466 = vmatpush1.msra.mxu0 %v89
    %467 = vmatprep.subr.mxu0 0.0
    %468 = vmatpush1.msra.mxu0 %v90
    %469 = vmatprep.subr.mxu0 0.0
    %470 = vmatpush1.msra.mxu0 0.0
    %471 = vmatprep.subr.mxu0 0.0
    %472 = vmatpush1.msra.mxu0 0.0
    %473 = vmatprep.subr.mxu0 0.0
    %474 = vmatpush1.msra.mxu0 0.0
    %475 = vmatprep.subr.mxu0 0.0
    %476 = vmatpush1.msra.mxu0 0.0
    %477 = vmatprep.subr.mxu0 0.0
    %478 = vmatpush1.msra.mxu0 0.0
    %479 = vmatprep.subr.mxu0 0.0
    %480 = vmatpush1.msra.mxu0 0.0
    %481 = vmatprep.subr.mxu0 0.0
    %482 = vmatpush1.msra.mxu0 0.0
    %483 = vmatprep.subr.mxu0 0.0
    %484 = vmatpush1.msra.mxu0 0.0
    %485 = vmatprep.subr.mxu0 0.0
    %486 = vmatpush1.msra.mxu0 0.0
    %487 = vmatprep.subr.mxu0 0.0
    %488 = vmatpush1.msra.mxu0 0.0
    %489 = vmatprep.subr.mxu0 0.0
    %490 = vmatpush1.msra.mxu0 0.0
    %491 = vmatprep.subr.mxu0 0.0
    %492 = vmatpush1.msra.mxu0 0.0
    %493 = vmatprep.subr.mxu0 0.0
    %494 = vmatpush1.msra.mxu0 0.0
    %495 = vmatprep.subr.mxu0 0.0
    %496 = vmatpush1.msra.mxu0 0.0
    %497 = vmatprep.subr.mxu0 0.0
    %498 = vmatpush1.msra.mxu0 0.0
    %499 = vmatprep.subr.mxu0 0.0
    %500 = vmatpush1.msra.mxu0 0.0
    %501 = vmatprep.subr.mxu0 0.0
    %502 = vmatpush1.msra.mxu0 0.0
    %503 = vmatprep.subr.mxu0 0.0
    %504 = vmatpush1.msra.mxu0 0.0
    %505 = vmatprep.subr.mxu0 0.0
    %506 = vmatpush1.msra.mxu0 0.0
    %507 = vmatprep.subr.mxu0 0.0
    %508 = vmatpush1.msra.mxu0 0.0
    %509 = vmatprep.subr.mxu0 0.0
    %510 = vmatpush1.msra.mxu0 0.0
    %511 = vmatprep.subr.mxu0 0.0
    %512 = vmatpush1.msra.mxu0 0.0
    %513 = vmatprep.subr.mxu0 0.0
    %514 = vmatpush1.msra.mxu0 0.0
    %515 = vmatprep.subr.mxu0 0.0
    %516 = vmatpush1.msra.mxu0 0.0
    %517 = vmatprep.subr.mxu0 0.0
    %518 = vmatpush1.msra.mxu0 0.0
    %519 = vmatprep.subr.mxu0 0.0
    %520 = vmatpush1.msra.mxu0 0.0
    %521 = vmatprep.subr.mxu0 0.0
    %522 = vmatpush1.msra.mxu0 0.0
    %523 = vmatprep.subr.mxu0 0.0
    %524 = vmatpush1.msra.mxu0 0.0
    %525 = vmatprep.subr.mxu0 0.0
    %526 = vmatpush1.msra.mxu0 0.0
    %527 = vmatprep.subr.mxu0 0.0
    %528 = vmatpush1.msra.mxu0 0.0
    %529 = vmatprep.mubr.f32.mxu0 0.0
    %530 = vmatmul.mubr.f32.gmra.mrb[0].mxu0 %v463
    %v531 = vpop.f32.mrb[0].mxu0
    %v532 = vadd.f32 0.0, %v531
    %v533 = vpop.f32.mrb[0].mxu0
    %534 = vdwg.mxu0
    %v535 = vadd.f32 %v459, %v532
    %v537 = vsel %vm388, %v313, 0
    %539 = vmatprep.subr.mxu0 0.0
    %540 = vmatpush1.msra.mxu0 %v91
    %541 = vmatprep.subr.mxu0 0.0
    %542 = vmatpush1.msra.mxu0 %v92
    %543 = vmatprep.subr.mxu0 0.0
    %544 = vmatpush1.msra.mxu0 0.0
    %545 = vmatprep.subr.mxu0 0.0
    %546 = vmatpush1.msra.mxu0 0.0
    %547 = vmatprep.subr.mxu0 0.0
    %548 = vmatpush1.msra.mxu0 0.0
    %549 = vmatprep.subr.mxu0 0.0
    %550 = vmatpush1.msra.mxu0 0.0
    %551 = vmatprep.subr.mxu0 0.0
    %552 = vmatpush1.msra.mxu0 0.0
    %553 = vmatprep.subr.mxu0 0.0
    %554 = vmatpush1.msra.mxu0 0.0
    %555 = vmatprep.subr.mxu0 0.0
    %556 = vmatpush1.msra.mxu0 0.0
    %557 = vmatprep.subr.mxu0 0.0
    %558 = vmatpush1.msra.mxu0 0.0
    %559 = vmatprep.subr.mxu0 0.0
    %560 = vmatpush1.msra.mxu0 0.0
    %561 = vmatprep.subr.mxu0 0.0
    %562 = vmatpush1.msra.mxu0 0.0
    %563 = vmatprep.subr.mxu0 0.0
    %564 = vmatpush1.msra.mxu0 0.0
    %565 = vmatprep.subr.mxu0 0.0
    %566 = vmatpush1.msra.mxu0 0.0
    %567 = vmatprep.subr.mxu0 0.0
    %568 = vmatpush1.msra.mxu0 0.0
    %569 = vmatprep.subr.mxu0 0.0
    %570 = vmatpush1.msra.mxu0 0.0
    %571 = vmatprep.subr.mxu0 0.0
    %572 = vmatpush1.msra.mxu0 0.0
    %573 = vmatprep.subr.mxu0 0.0
    %574 = vmatpush1.msra.mxu0 0.0
    %575 = vmatprep.subr.mxu0 0.0
    %576 = vmatpush1.msra.mxu0 0.0
    %577 = vmatprep.subr.mxu0 0.0
    %578 = vmatpush1.msra.mxu0 0.0
    %579 = vmatprep.subr.mxu0 0.0
    %580 = vmatpush1.msra.mxu0 0.0
    %581 = vmatprep.subr.mxu0 0.0
    %582 = vmatpush1.msra.mxu0 0.0
    %583 = vmatprep.subr.mxu0 0.0
    %584 = vmatpush1.msra.mxu0 0.0
    %585 = vmatprep.subr.mxu0 0.0
    %586 = vmatpush1.msra.mxu0 0.0
    %587 = vmatprep.subr.mxu0 0.0
    %588 = vmatpush1.msra.mxu0 0.0
    %589 = vmatprep.subr.mxu0 0.0
    %590 = vmatpush1.msra.mxu0 0.0
    %591 = vmatprep.subr.mxu0 0.0
    %592 = vmatpush1.msra.mxu0 0.0
    %593 = vmatprep.subr.mxu0 0.0
    %594 = vmatpush1.msra.mxu0 0.0
    %595 = vmatprep.subr.mxu0 0.0
    %596 = vmatpush1.msra.mxu0 0.0
    %597 = vmatprep.subr.mxu0 0.0
    %598 = vmatpush1.msra.mxu0 0.0
    %599 = vmatprep.subr.mxu0 0.0
    %600 = vmatpush1.msra.mxu0 0.0
    %601 = vmatprep.subr.mxu0 0.0
    %602 = vmatpush1.msra.mxu0 0.0
    %603 = vmatprep.mubr.f32.mxu0 0.0
    %604 = vmatmul.mubr.f32.gmra.mrb[0].mxu0 %v537
    %v605 = vpop.f32.mrb[0].mxu0
    %v606 = vadd.f32 0.0, %v605
    %v607 = vpop.f32.mrb[0].mxu0
    %608 = vdwg.mxu0
    %v609 = vadd.f32 %v535, %v606
    %v611 = vlaneseq
    %v612 = vshrl.u32 %v611, 7
    %v613 = vsub.s32 0, %v612
    %v614 = vrot.slane %v93, %v613
    %v616 = vadd.f32 %v609, %v614
    %v617 = vmax.f32 %v616, 0.0
    %v618 = vand.u32 2147483647, %v616
    %v619 = vsub.f32 0.0, %v618
    %v620 = vmul.f32 %v619, 1.442695
    %v621 = vpow.pop %v620
    %v622 = vadd.f32 %v621, 1.0
    %v623 = vlog2.pop %v622
    %v624 = vmul.f32 %v623, 0.6931472
    %v625 = vadd.f32 %v617, %v624
    %v626 = vtanh.pop %v625
    %v627 = vmul.f32 %v616, %v626
    %v628 = vld [vmem:[%s9] sm:$0xff]
    %v629 = vld [vmem:[%s9 + $0x8] sm:$0xff]
    %v630 = vld [vmem:[%s9 + $0x10] sm:$0xff]
    %v631 = vld [vmem:[%s9 + $0x18] sm:$0xff]
    %v632 = vld [vmem:[%s9 + $0x20] sm:$0xff]
    %v633 = vld [vmem:[%s9 + $0x28] sm:$0xff]
    %v634 = vld [vmem:[%s9 + $0x30] sm:$0xff]
    %v635 = vld [vmem:[%s9 + $0x38] sm:$0xff]
    %v636 = vld [vmem:[%s10] sm:$0x1]
    %v638 = vlaneseq
    %v639 = vshrl.u32 %v638, 7
    %v640 = vsub.s32 0, %v639
    %v641 = vrot.slane %v636, %v640
    %vm643 = vcmask 523264
    %v645 = vsel %vm643, %v627, 0
    %647 = vmatprep.subr.mxu0 0.0
    %648 = vmatpush1.msra.mxu0 %v628
    %649 = vmatprep.subr.mxu0 0.0
    %650 = vmatpush1.msra.mxu0 %v629
    %651 = vmatprep.subr.mxu0 0.0
    %652 = vmatpush1.msra.mxu0 %v630
    %653 = vmatprep.subr.mxu0 0.0
    %654 = vmatpush1.msra.mxu0 %v631
    %655 = vmatprep.subr.mxu0 0.0
    %656 = vmatpush1.msra.mxu0 %v632
    %657 = vmatprep.subr.mxu0 0.0
    %658 = vmatpush1.msra.mxu0 %v633
    %659 = vmatprep.subr.mxu0 0.0
    %660 = vmatpush1.msra.mxu0 %v634
    %661 = vmatprep.subr.mxu0 0.0
    %662 = vmatpush1.msra.mxu0 %v635
    %663 = vmatprep.subr.mxu0 0.0
    %664 = vmatpush1.msra.mxu0 0.0
    %665 = vmatprep.subr.mxu0 0.0
    %666 = vmatpush1.msra.mxu0 0.0
    %667 = vmatprep.subr.mxu0 0.0
    %668 = vmatpush1.msra.mxu0 0.0
    %669 = vmatprep.subr.mxu0 0.0
    %670 = vmatpush1.msra.mxu0 0.0
    %671 = vmatprep.subr.mxu0 0.0
    %672 = vmatpush1.msra.mxu0 0.0
    %673 = vmatprep.subr.mxu0 0.0
    %674 = vmatpush1.msra.mxu0 0.0
    %675 = vmatprep.subr.mxu0 0.0
    %676 = vmatpush1.msra.mxu0 0.0
    %677 = vmatprep.subr.mxu0 0.0
    %678 = vmatpush1.msra.mxu0 0.0
    %679 = vmatprep.subr.mxu0 0.0
    %680 = vmatpush1.msra.mxu0 0.0
    %681 = vmatprep.subr.mxu0 0.0
    %682 = vmatpush1.msra.mxu0 0.0
    %683 = vmatprep.subr.mxu0 0.0
    %684 = vmatpush1.msra.mxu0 0.0
    %685 = vmatprep.subr.mxu0 0.0
    %686 = vmatpush1.msra.mxu0 0.0
    %687 = vmatprep.subr.mxu0 0.0
    %688 = vmatpush1.msra.mxu0 0.0
    %689 = vmatprep.subr.mxu0 0.0
    %690 = vmatpush1.msra.mxu0 0.0
    %691 = vmatprep.subr.mxu0 0.0
    %692 = vmatpush1.msra.mxu0 0.0
    %693 = vmatprep.subr.mxu0 0.0
    %694 = vmatpush1.msra.mxu0 0.0
    %695 = vmatprep.subr.mxu0 0.0
    %696 = vmatpush1.msra.mxu0 0.0
    %697 = vmatprep.subr.mxu0 0.0
    %698 = vmatpush1.msra.mxu0 0.0
    %699 = vmatprep.subr.mxu0 0.0
    %700 = vmatpush1.msra.mxu0 0.0
    %701 = vmatprep.subr.mxu0 0.0
    %702 = vmatpush1.msra.mxu0 0.0
    %703 = vmatprep.subr.mxu0 0.0
    %704 = vmatpush1.msra.mxu0 0.0
    %705 = vmatprep.subr.mxu0 0.0
    %706 = vmatpush1.msra.mxu0 0.0
    %707 = vmatprep.subr.mxu0 0.0
    %708 = vmatpush1.msra.mxu0 0.0
    %709 = vmatprep.subr.mxu0 0.0
    %710 = vmatpush1.msra.mxu0 0.0
    %711 = vmatprep.mubr.f32.mxu0 0.0
    %712 = vmatmul.mubr.f32.gmra.mrb[0].mxu0 %v645
    %v713 = vpop.f32.mrb[0].mxu0
    %v714 = vadd.f32 %v641, %v713
    %v715 = vpop.f32.mrb[0].mxu0
    %716 = vdwg.mxu0
    %v717 = vmax.f32 %v714, 0.0
    %v718 = vand.u32 2147483647, %v714
    %v719 = vsub.f32 0.0, %v718
    %v720 = vmul.f32 %v719, 1.442695
    %v721 = vpow.pop %v720
    %v722 = vadd.f32 %v721, 1.0
    %v723 = vlog2.pop %v722
    %v724 = vmul.f32 %v723, 0.6931472
    %v725 = vadd.f32 %v717, %v724
    %v726 = vtanh.pop %v725
    %v727 = vmul.f32 %v714, %v726
    %v728 = vld [vmem:[%s11] sm:$0xff]
    %v729 = vld [vmem:[%s11 + $0x8] sm:$0xff]
    %v730 = vld [vmem:[%s11 + $0x10] sm:$0xff]
    %v731 = vld [vmem:[%s11 + $0x18] sm:$0xff]
    %v732 = vld [vmem:[%s11 + $0x20] sm:$0xff]
    %v733 = vld [vmem:[%s11 + $0x28] sm:$0xff]
    %v734 = vld [vmem:[%s11 + $0x30] sm:$0xff]
    %v735 = vld [vmem:[%s11 + $0x38] sm:$0xff]
    %v736 = vld [vmem:[%s12] sm:$0x1]
    %v738 = vlaneseq
    %v739 = vshrl.u32 %v738, 7
    %v740 = vsub.s32 0, %v739
    %v741 = vrot.slane %v736, %v740
    %v744 = vsel %vm643, %v727, 0
    %746 = vmatprep.subr.mxu0 0.0
    %747 = vmatpush1.msra.mxu0 %v728
    %748 = vmatprep.subr.mxu0 0.0
    %749 = vmatpush1.msra.mxu0 %v729
    %750 = vmatprep.subr.mxu0 0.0
    %751 = vmatpush1.msra.mxu0 %v730
    %752 = vmatprep.subr.mxu0 0.0
    %753 = vmatpush1.msra.mxu0 %v731
    %754 = vmatprep.subr.mxu0 0.0
    %755 = vmatpush1.msra.mxu0 %v732
    %756 = vmatprep.subr.mxu0 0.0
    %757 = vmatpush1.msra.mxu0 %v733
    %758 = vmatprep.subr.mxu0 0.0
    %759 = vmatpush1.msra.mxu0 %v734
    %760 = vmatprep.subr.mxu0 0.0
    %761 = vmatpush1.msra.mxu0 %v735
    %762 = vmatprep.subr.mxu0 0.0
    %763 = vmatpush1.msra.mxu0 0.0
    %764 = vmatprep.subr.mxu0 0.0
    %765 = vmatpush1.msra.mxu0 0.0
    %766 = vmatprep.subr.mxu0 0.0
    %767 = vmatpush1.msra.mxu0 0.0
    %768 = vmatprep.subr.mxu0 0.0
    %769 = vmatpush1.msra.mxu0 0.0
    %770 = vmatprep.subr.mxu0 0.0
    %771 = vmatpush1.msra.mxu0 0.0
    %772 = vmatprep.subr.mxu0 0.0
    %773 = vmatpush1.msra.mxu0 0.0
    %774 = vmatprep.subr.mxu0 0.0
    %775 = vmatpush1.msra.mxu0 0.0
    %776 = vmatprep.subr.mxu0 0.0
    %777 = vmatpush1.msra.mxu0 0.0
    %778 = vmatprep.subr.mxu0 0.0
    %779 = vmatpush1.msra.mxu0 0.0
    %780 = vmatprep.subr.mxu0 0.0
    %781 = vmatpush1.msra.mxu0 0.0
    %782 = vmatprep.subr.mxu0 0.0
    %783 = vmatpush1.msra.mxu0 0.0
    %784 = vmatprep.subr.mxu0 0.0
    %785 = vmatpush1.msra.mxu0 0.0
    %786 = vmatprep.subr.mxu0 0.0
    %787 = vmatpush1.msra.mxu0 0.0
    %788 = vmatprep.subr.mxu0 0.0
    %789 = vmatpush1.msra.mxu0 0.0
    %790 = vmatprep.subr.mxu0 0.0
    %791 = vmatpush1.msra.mxu0 0.0
    %792 = vmatprep.subr.mxu0 0.0
    %793 = vmatpush1.msra.mxu0 0.0
    %794 = vmatprep.subr.mxu0 0.0
    %795 = vmatpush1.msra.mxu0 0.0
    %796 = vmatprep.subr.mxu0 0.0
    %797 = vmatpush1.msra.mxu0 0.0
    %798 = vmatprep.subr.mxu0 0.0
    %799 = vmatpush1.msra.mxu0 0.0
    %800 = vmatprep.subr.mxu0 0.0
    %801 = vmatpush1.msra.mxu0 0.0
    %802 = vmatprep.subr.mxu0 0.0
    %803 = vmatpush1.msra.mxu0 0.0
    %804 = vmatprep.subr.mxu0 0.0
    %805 = vmatpush1.msra.mxu0 0.0
    %806 = vmatprep.subr.mxu0 0.0
    %807 = vmatpush1.msra.mxu0 0.0
    %808 = vmatprep.subr.mxu0 0.0
    %809 = vmatpush1.msra.mxu0 0.0
    %810 = vmatprep.mubr.f32.mxu0 0.0
    %811 = vmatmul.mubr.f32.gmra.mrb[0].mxu0 %v744
    %v812 = vpop.f32.mrb[0].mxu0
    %v813 = vadd.f32 %v741, %v812
    %v814 = vpop.f32.mrb[0].mxu0
    %815 = vdwg.mxu0
    %816 = vst.msk [vmem:[#allocation8] sm:$0xff] %vm388, %v813
    // Predicated region
    $region66: #{tpu_custom_call.1} parent=1 // pred_check
      _
    $region67: #{tpu_custom_call.1} parent=1 // pred_check_branch
      %818 = sbr.rel (0) target = $region69
    $region68: #{tpu_custom_call.1} parent=1 // pred_region
      %s820 = ssub.s32 128, 128
      %821 = vsyncadd [#allocation4], %s820
      %s823 = sshll.u32 [#allocation8], 4
      %s824 = int_to_ptr.vmem [resolvable:$true] %s823
      %826 = dma.vmem_to_hbm [thread:$0]  %s824, 128, %s13, [#allocation4]
    $region69: #{tpu_custom_call.1} parent=1 // pred_fallthru
      _
    // Predicated region
    $region70: #{tpu_custom_call.1} parent=1 // pred_check
      _
    $region71: #{tpu_custom_call.1} parent=1 // pred_check_branch
      %828 = sbr.rel (0) target = $region73
    $region72: #{tpu_custom_call.1} parent=1 // pred_region
      %829 = dma.done [#allocation4], 128
    $region73: #{tpu_custom_call.1} parent=1 // pred_fallthru
      _
    %830 = vsyncpa [#allocation3], 1
    %831 = vsyncpa [#allocation6], 1
    %832 = vsyncpa [#allocation4], 1

</llo_original>
